<compile_context>
chip_gen: v7x
topology: tpu7x:2x2x1
jax: 0.10.0
libtpu: 0.0.40
codegen_flags: <defaults>
</compile_context>

<pallas_src>
import functools
import math

import jax
import jax.numpy as jnp
from jax.experimental import pallas as pl
from jax.experimental.pallas import tpu as pltpu


# --------------------------------------------------------------------------
# shared helpers
# --------------------------------------------------------------------------
def _cparams():
    return pltpu.CompilerParams(
        dimension_semantics=("parallel",),
        vmem_limit_bytes=48 * 1024 * 1024,
    )


def _ln(x, g, b, eps=1e-5):
    # LayerNorm over the last dim, fp32 (matches the LayerNorm subclass behavior).
    mean = jnp.mean(x, axis=-1, keepdims=True)
    var = jnp.mean(jnp.square(x - mean), axis=-1, keepdims=True)
    return (x - mean) * jax.lax.rsqrt(var + eps) * g + b


def _const_spec(a):
    # grid-invariant (weight) input: full block, constant index_map
    return pl.BlockSpec(a.shape, lambda b, nd=a.ndim: (0,) * nd)


# --------------------------------------------------------------------------
# Kernel 1: fused patch-embed (conv1 as matmul) + [cls; patches] + pos + ln_pre + pad
# --------------------------------------------------------------------------
def embed_kernel(p_ref, w_ref, cls_ref, pos_ref, g_ref, b_ref, o_ref, *, seq_len):
    # p_ref: (1, Np, cpp) bf16   w_ref: (cpp, D) bf16
    # cls_ref: (1, D) f32  pos_ref: (S, D) f32  g/b: (1, D) f32   o_ref: (1, S_pad, D) f32
    patches = jnp.dot(p_ref[0], w_ref[...], preferred_element_type=jnp.float32)  # (Np, D)
    g = g_ref[...]
    b = b_ref[...]
    cls_tok = _ln(cls_ref[...] + pos_ref[0:1, :], g, b)                  # (1, D)
    pat_tok = _ln(patches + pos_ref[1:seq_len, :], g, b)                 # (Np, D)
    o_ref[0, 0:1, :] = cls_tok
    o_ref[0, 1:seq_len, :] = pat_tok
    s_pad = o_ref.shape[1]
    if s_pad > seq_len:  # zero the padded rows (static branch)
        o_ref[0, seq_len:, :] = jnp.zeros((s_pad - seq_len, o_ref.shape[2]), jnp.float32)


# --------------------------------------------------------------------------
# Kernel 2: one ResidualAttentionBlock (per-batch grid step, batched-head attention)
# --------------------------------------------------------------------------
def resblock_kernel(x_ref, ln1g_ref, ln1b_ref, wqkv_ref, bqkv_ref,
                    woh_ref, bo_ref, ln2g_ref, ln2b_ref,
                    wfc_ref, bfc_ref, wpj_ref, bpj_ref, o_ref,
                    *, n_head, seq_len, ff_chunk):
    x = x_ref[0]                                    # (S_pad, D) fp32
    s_pad, d_model = x.shape
    hd = d_model // n_head
    scale = 1.0 / math.sqrt(hd)

    # ---- attention branch: ln_1 -> MHA -> + residual ----
    h = _ln(x, ln1g_ref[...], ln1b_ref[...])
    qkv = jnp.dot(h.astype(jnp.bfloat16), wqkv_ref[...],
                  preferred_element_type=jnp.float32) + bqkv_ref[...]    # (S_pad, 3D)

    def heads(m):                                   # (S_pad, D) -> (H, S_pad, hd)
        return jnp.stack([m[:, i * hd:(i + 1) * hd] for i in range(n_head)], axis=0)

    q_h = heads(qkv[:, :d_model].astype(jnp.bfloat16))
    k_h = heads(qkv[:, d_model:2 * d_model].astype(jnp.bfloat16))
    v_h = heads(qkv[:, 2 * d_model:].astype(jnp.bfloat16))

    # batched scores over all heads at once
    s = jnp.einsum('hqd,hkd->hqk', q_h, k_h,
                   preferred_element_type=jnp.float32) * scale           # (H, S_pad, S_pad)
    key_idx = jax.lax.broadcasted_iota(jnp.int32, s.shape, 2)
    s = jnp.where(key_idx < seq_len, s, -1e30)      # mask padded keys
    s = s - jnp.max(s, axis=-1, keepdims=True)
    e = jnp.exp(s)
    p = e * pl.reciprocal(jnp.sum(e, axis=-1, keepdims=True), approx=True)

    ctx = jnp.einsum('hqk,hkd->hqd', p.astype(jnp.bfloat16), v_h,
                     preferred_element_type=jnp.float32)                 # (H, S_pad, hd)
    # head-batched output projection, then reduce over heads (no concat / transpose)
    proj = jnp.einsum('hqd,hdo->hqo', ctx.astype(jnp.bfloat16), woh_ref[...],
                      preferred_element_type=jnp.float32)                # (H, S_pad, D)
    attn = jnp.sum(proj, axis=0) + bo_ref[...]                           # (S_pad, D)
    x1 = x + attn

    # ---- MLP branch: ln_2 -> c_fc -> QuickGELU -> c_proj -> + residual ----
    h2 = _ln(x1, ln2g_ref[...], ln2b_ref[...]).astype(jnp.bfloat16)
    d_ff = wfc_ref.shape[-1]
    mlp = jnp.zeros((s_pad, d_model), jnp.float32)
    for c0 in range(0, d_ff, ff_chunk):             # static column-chunk loop
        c1 = min(d_ff, c0 + ff_chunk)
        f = jnp.dot(h2, wfc_ref[:, c0:c1],
                    preferred_element_type=jnp.float32) + bfc_ref[:, c0:c1]
        f = f * jax.nn.sigmoid(1.702 * f)           # QuickGELU (fp32)
        mlp = mlp + jnp.dot(f.astype(jnp.bfloat16), wpj_ref[c0:c1, :],
                            preferred_element_type=jnp.float32)

    o_ref[0] = x1 + mlp + bpj_ref[...]


# --------------------------------------------------------------------------
# Kernel 3: ln_post (per-batch tiled)
# --------------------------------------------------------------------------
def ln_kernel(x_ref, g_ref, b_ref, o_ref):
    o_ref[0] = _ln(x_ref[0], g_ref[...], b_ref[...])


# --------------------------------------------------------------------------
# Pallas wrappers
# --------------------------------------------------------------------------
def embed_and_ln_pre(patches_bf16, prep, *, seq_len, seq_pad):
    B, Np, cpp = patches_bf16.shape
    D = prep['conv_w'].shape[-1]
    args = [prep['conv_w'], prep['class_embedding'], prep['positional_embedding'],
            prep['ln_pre_g'], prep['ln_pre_b']]
    in_specs = [pl.BlockSpec((1, Np, cpp), lambda b: (b, 0, 0))] + [_const_spec(a) for a in args]
    return pl.pallas_call(
        functools.partial(embed_kernel, seq_len=seq_len),
        grid=(B,),
        in_specs=in_specs,
        out_specs=pl.BlockSpec((1, seq_pad, D), lambda b: (b, 0, 0)),
        out_shape=jax.ShapeDtypeStruct((B, seq_pad, D), jnp.float32),
        compiler_params=_cparams(),
    )(patches_bf16, *args)


def resblock(x, blk, *, n_head, seq_len, ff_chunk):
    B, S_pad, D = x.shape
    args = [blk['ln1_g'], blk['ln1_b'], blk['wqkv'], blk['bqkv'],
            blk['wo_h'], blk['bo'], blk['ln2_g'], blk['ln2_b'],
            blk['wfc'], blk['bfc'], blk['wpj'], blk['bpj']]
    in_specs = [pl.BlockSpec((1, S_pad, D), lambda b: (b, 0, 0))] + [_const_spec(a) for a in args]
    return pl.pallas_call(
        functools.partial(resblock_kernel, n_head=n_head, seq_len=seq_len, ff_chunk=ff_chunk),
        grid=(B,),
        in_specs=in_specs,
        out_specs=pl.BlockSpec((1, S_pad, D), lambda b: (b, 0, 0)),
        out_shape=jax.ShapeDtypeStruct((B, S_pad, D), jnp.float32),
        compiler_params=_cparams(),
    )(x, *args)


def ln_post_call(x, g, b):
    B, S_pad, D = x.shape
    args = [g, b]
    in_specs = [pl.BlockSpec((1, S_pad, D), lambda b: (b, 0, 0))] + [_const_spec(a) for a in args]
    return pl.pallas_call(
        ln_kernel,
        grid=(B,),
        in_specs=in_specs,
        out_specs=pl.BlockSpec((1, S_pad, D), lambda b: (b, 0, 0)),
        out_shape=jax.ShapeDtypeStruct((B, S_pad, D), jnp.float32),
        compiler_params=_cparams(),
    )(x, *args)


def visual_transformer_forward(x, prep, *, patch_size, heads):
    B, C, H, W = x.shape
    cpp, D = prep['conv_w'].shape
    gh, gw = H // patch_size, W // patch_size
    Np = gh * gw
    S = Np + 1
    S_pad = ((S + 7) // 8) * 8

    # conv1 (stride == kernel, no bias) as patch unfold; bf16 halves the HBM->VMEM DMA.
    p = x.reshape(B, C, gh, patch_size, gw, patch_size)
    p = p.transpose(0, 2, 4, 1, 3, 5).reshape(B, Np, C * patch_size * patch_size)
    p = p.astype(jnp.bfloat16)

    # fused: patch-embed matmul + [cls; patches] + positional embedding + ln_pre + pad
    h = embed_and_ln_pre(p, prep, seq_len=S, seq_pad=S_pad)

    ff_chunk = min(prep['blocks'][0]['wfc'].shape[-1], 512) if prep['blocks'] else 512
    for blk in prep['blocks']:
        h = resblock(h, blk, n_head=heads, seq_len=S, ff_chunk=ff_chunk)

    out = ln_post_call(h, prep['ln_post_g'], prep['ln_post_b'])
    return out[:, :S, :]


# --------------------------------------------------------------------------
# parameter init (torch-shaped fp32) + one-time kernel-layout / bf16 prep
# --------------------------------------------------------------------------
def init_params(key, *, patch_size, width, layers, resolution_after):
    D = width
    n_blocks = layers - 1          # Transformer builds layers - 1 residual blocks
    ks = iter(jax.random.split(key, 8 + n_blocks * 12))
    scale = D ** -0.5
    params = {
        'conv_w': 0.02 * jax.random.normal(next(ks), (D, 3, patch_size, patch_size), jnp.float32),
        'class_embedding': scale * jax.random.normal(next(ks), (D,), jnp.float32),
        'positional_embedding': scale * jax.random.normal(
            next(ks), ((resolution_after // patch_size) ** 2 + 1, D), jnp.float32),
        'ln_pre_g': jnp.ones((D,), jnp.float32), 'ln_pre_b': jnp.zeros((D,), jnp.float32),
        'ln_post_g': jnp.ones((D,), jnp.float32), 'ln_post_b': jnp.zeros((D,), jnp.float32),
        'blocks': [],
    }
    for _ in range(n_blocks):
        params['blocks'].append({
            'ln1_g': jnp.ones((D,), jnp.float32), 'ln1_b': jnp.zeros((D,), jnp.float32),
            'wqkv': 0.02 * jax.random.normal(next(ks), (3 * D, D), jnp.float32),  # in_proj_weight
            'bqkv': 0.02 * jax.random.normal(next(ks), (3 * D,), jnp.float32),
            'wo':   0.02 * jax.random.normal(next(ks), (D, D), jnp.float32),      # out_proj.weight
            'bo':   0.02 * jax.random.normal(next(ks), (D,), jnp.float32),
            'ln2_g': jnp.ones((D,), jnp.float32), 'ln2_b': jnp.zeros((D,), jnp.float32),
            'wfc':  0.02 * jax.random.normal(next(ks), (4 * D, D), jnp.float32),  # c_fc.weight
            'bfc':  0.02 * jax.random.normal(next(ks), (4 * D,), jnp.float32),
            'wpj':  0.02 * jax.random.normal(next(ks), (D, 4 * D), jnp.float32),  # c_proj.weight
            'bpj':  0.02 * jax.random.normal(next(ks), (D,), jnp.float32),
        })
    return params


def prepare_params(params, *, heads):
    # one-time layout/dtype prep: pre-transpose/reshape the matmul weights and cast to bf16;
    # LayerNorm params and biases stay fp32 (as (1, n) rows).
    D = params['conv_w'].shape[0]
    hd = D // heads
    prep = {
        'conv_w': params['conv_w'].reshape(D, -1).T.astype(jnp.bfloat16),        # (cpp, D)
        'class_embedding': params['class_embedding'].reshape(1, D),
        'positional_embedding': params['positional_embedding'],                   # (S, D)
        'ln_pre_g': params['ln_pre_g'].reshape(1, D),
        'ln_pre_b': params['ln_pre_b'].reshape(1, D),
        'ln_post_g': params['ln_post_g'].reshape(1, D),
        'ln_post_b': params['ln_post_b'].reshape(1, D),
        'blocks': [],
    }
    for blk in params['blocks']:
        prep['blocks'].append({
            'ln1_g': blk['ln1_g'].reshape(1, D), 'ln1_b': blk['ln1_b'].reshape(1, D),
            'wqkv': blk['wqkv'].T.astype(jnp.bfloat16),                          # (D, 3D)
            'bqkv': blk['bqkv'].reshape(1, 3 * D),
            'wo_h': blk['wo'].T.reshape(heads, hd, D).astype(jnp.bfloat16),      # (H, hd, D)
            'bo':   blk['bo'].reshape(1, D),
            'ln2_g': blk['ln2_g'].reshape(1, D), 'ln2_b': blk['ln2_b'].reshape(1, D),
            'wfc':  blk['wfc'].T.astype(jnp.bfloat16),                           # (D, 4D)
            'bfc':  blk['bfc'].reshape(1, 4 * D),
            'wpj':  blk['wpj'].T.astype(jnp.bfloat16),                           # (4D, D)
            'bpj':  blk['bpj'].reshape(1, D),
        })
    return prep


# --------------------------------------------------------------------------
# pure-JAX fp32 reference (original module math) for correctness checking
# --------------------------------------------------------------------------
def reference_forward(x, params, *, patch_size, heads):
    B, C, H, W = x.shape
    D = params['conv_w'].shape[0]
    gh, gw = H // patch_size, W // patch_size
    Np = gh * gw
    cpp = C * patch_size * patch_size
    p = x.reshape(B, C, gh, patch_size, gw, patch_size).transpose(0, 2, 4, 1, 3, 5).reshape(B, Np, cpp)
    tokp = p @ params['conv_w'].reshape(D, cpp).T
    cls = jnp.broadcast_to(params['class_embedding'][None, None], (B, 1, D))
    t = jnp.concatenate([cls, tokp], 1) + params['positional_embedding'][None]

    def ln(v, g, b):
        m = v.mean(-1, keepdims=True)
        var = ((v - m) ** 2).mean(-1, keepdims=True)
        return (v - m) / jnp.sqrt(var + 1e-5) * g + b

    h = ln(t, params['ln_pre_g'], params['ln_pre_b'])
    hd = D // heads
    for blk in params['blocks']:
        z = ln(h, blk['ln1_g'], blk['ln1_b'])
        qkv = z @ blk['wqkv'].T + blk['bqkv']
        q, k, v = jnp.split(qkv, 3, axis=-1)
        q = q.reshape(B, -1, heads, hd).transpose(0, 2, 1, 3)
        k = k.reshape(B, -1, heads, hd).transpose(0, 2, 1, 3)
        v = v.reshape(B, -1, heads, hd).transpose(0, 2, 1, 3)
        s = (q * (hd ** -0.5)) @ k.transpose(0, 1, 3, 2)
        pm = jax.nn.softmax(s, -1)
        a = (pm @ v).transpose(0, 2, 1, 3).reshape(B, -1, D)
        h = h + a @ blk['wo'].T + blk['bo']
        z2 = ln(h, blk['ln2_g'], blk['ln2_b'])
        f = z2 @ blk['wfc'].T + blk['bfc']
        f = f * jax.nn.sigmoid(1.702 * f)
        h = h + f @ blk['wpj'].T + blk['bpj']
    return ln(h, params['ln_post_g'], params['ln_post_b'])


# --------------------------------------------------------------------------
if __name__ == "__main__":
    key = jax.random.PRNGKey(0)
    kx, kp = jax.random.split(key)

    # small config: patch_size=4, width=32, layers=3, heads=4, resolution=16 -> seq = 17
    patch_size, width, layers, heads, resolution = 4, 32, 3, 4, 16

    x = jax.random.normal(kx, (2, 3, resolution, resolution), jnp.float32)
    params = init_params(kp, patch_size=patch_size, width=width,
                         layers=layers, resolution_after=resolution)
    prep = prepare_params(params, heads=heads)

    out = visual_transformer_forward(x, prep, patch_size=patch_size, heads=heads)
    out = jax.block_until_ready(out)

    ref = reference_forward(x, params, patch_size=patch_size, heads=heads)
    S = (resolution // patch_size) ** 2 + 1
    assert out.shape == (2, S, width)
    assert bool(jnp.all(jnp.isfinite(out)))
    # bf16 MXU operands + approx softmax reciprocal vs. the fp32 reference -> relaxed tolerance
    assert bool(jnp.allclose(out, ref, atol=3e-2, rtol=3e-2))

    print("KERNEL_OK")
</pallas_src>

<mosaic_0001>
module attributes {stable_mosaic.version = 11 : i64} {
  func.func @embed_kernel(%arg0: i32, %arg1: memref<1x16x48xbf16, #tpu.memory_space<vmem>>, %arg2: memref<48x32xbf16, #tpu.memory_space<vmem>>, %arg3: memref<1x32xf32, #tpu.memory_space<vmem>>, %arg4: memref<17x32xf32, #tpu.memory_space<vmem>>, %arg5: memref<1x32xf32, #tpu.memory_space<vmem>>, %arg6: memref<1x32xf32, #tpu.memory_space<vmem>>, %arg7: memref<1x24x32xf32, #tpu.memory_space<vmem>>) attributes {dimension_semantics = [#tpu.dimension_semantics<parallel>], iteration_bounds = array<i64: 2>, scalar_prefetch = 0 : i64, scratch_operands = 0 : i64, tpu.core_type = #tpu.core_type<tc>, window_params = [{transform_indices = @transform_0, window_bounds = array<i64: 1, 16, 48>}, {pipeline_mode = #tpu.pipeline_mode<synchronous>, transform_indices = @transform_1, window_bounds = array<i64: 48, 32>}, {pipeline_mode = #tpu.pipeline_mode<synchronous>, transform_indices = @transform_2, window_bounds = array<i64: 1, 32>}, {pipeline_mode = #tpu.pipeline_mode<synchronous>, transform_indices = @transform_3, window_bounds = array<i64: 17, 32>}, {pipeline_mode = #tpu.pipeline_mode<synchronous>, transform_indices = @transform_4, window_bounds = array<i64: 1, 32>}, {pipeline_mode = #tpu.pipeline_mode<synchronous>, transform_indices = @transform_5, window_bounds = array<i64: 1, 32>}, {transform_indices = @transform_6, window_bounds = array<i64: 1, 24, 32>}]} {
    %c0 = arith.constant 0 : index
    %c0_0 = arith.constant 0 : index
    %c0_1 = arith.constant 0 : index
    %0 = vector.load %arg1[%c0, %c0_0, %c0_1] : memref<1x16x48xbf16, #tpu.memory_space<vmem>>, vector<1x16x48xbf16>
    %1 = vector.shape_cast %0 : vector<1x16x48xbf16> to vector<16x48xbf16>
    %c0_2 = arith.constant 0 : index
    %c0_3 = arith.constant 0 : index
    %2 = vector.load %arg2[%c0_2, %c0_3] : memref<48x32xbf16, #tpu.memory_space<vmem>>, vector<48x32xbf16>
    %cst = arith.constant dense<0.000000e+00> : vector<16x32xf32>
    %3 = tpu.matmul %1, %2, %cst {dimension_numbers = #tpu.dot_dimension_numbers<[1], [0], [0], [1], [0, 0, 1, 1], [], []>} : vector<16x48xbf16>, vector<48x32xbf16>, vector<16x32xf32> -> vector<16x32xf32>
    %c0_4 = arith.constant 0 : index
    %c0_5 = arith.constant 0 : index
    %4 = vector.load %arg5[%c0_4, %c0_5] : memref<1x32xf32, #tpu.memory_space<vmem>>, vector<1x32xf32>
    %c0_6 = arith.constant 0 : index
    %c0_7 = arith.constant 0 : index
    %5 = vector.load %arg6[%c0_6, %c0_7] : memref<1x32xf32, #tpu.memory_space<vmem>>, vector<1x32xf32>
    %c0_8 = arith.constant 0 : index
    %c0_9 = arith.constant 0 : index
    %6 = vector.load %arg3[%c0_8, %c0_9] : memref<1x32xf32, #tpu.memory_space<vmem>>, vector<1x32xf32>
    %c0_10 = arith.constant 0 : index
    %c0_11 = arith.constant 0 : index
    %7 = vector.load %arg4[%c0_10, %c0_11] : memref<17x32xf32, #tpu.memory_space<vmem>>, vector<1x32xf32>
    %8 = arith.addf %6, %7 : vector<1x32xf32>
    %cst_12 = arith.constant dense<0.000000e+00> : vector<1xf32>
    %9 = vector.multi_reduction <add>, %8, %cst_12 [1] : vector<1x32xf32> to vector<1xf32>
    %10 = vector.shape_cast %9 : vector<1xf32> to vector<1x1xf32>
    %cst_13 = arith.constant 3.200000e+01 : f32
    %11 = vector.broadcast %cst_13 : f32 to vector<1x1xf32>
    %12 = arith.divf %10, %11 : vector<1x1xf32>
    %13 = vector.broadcast %12 : vector<1x1xf32> to vector<1x32xf32>
    %14 = arith.subf %8, %13 : vector<1x32xf32>
    %15 = arith.mulf %14, %14 : vector<1x32xf32>
    %cst_14 = arith.constant dense<0.000000e+00> : vector<1xf32>
    %16 = vector.multi_reduction <add>, %15, %cst_14 [1] : vector<1x32xf32> to vector<1xf32>
    %17 = vector.shape_cast %16 : vector<1xf32> to vector<1x1xf32>
    %cst_15 = arith.constant 3.200000e+01 : f32
    %18 = vector.broadcast %cst_15 : f32 to vector<1x1xf32>
    %19 = arith.divf %17, %18 : vector<1x1xf32>
    %20 = vector.broadcast %12 : vector<1x1xf32> to vector<1x32xf32>
    %21 = arith.subf %8, %20 : vector<1x32xf32>
    %cst_16 = arith.constant 9.99999974E-6 : f32
    %22 = vector.broadcast %cst_16 : f32 to vector<1x1xf32>
    %23 = arith.addf %19, %22 : vector<1x1xf32>
    %24 = math.rsqrt %23 : vector<1x1xf32>
    %25 = vector.broadcast %24 : vector<1x1xf32> to vector<1x32xf32>
    %26 = arith.mulf %21, %25 : vector<1x32xf32>
    %27 = arith.mulf %26, %4 : vector<1x32xf32>
    %28 = arith.addf %27, %5 : vector<1x32xf32>
    %c1 = arith.constant 1 : index
    %c0_17 = arith.constant 0 : index
    %29 = vector.load %arg4[%c1, %c0_17] : memref<17x32xf32, #tpu.memory_space<vmem>>, vector<16x32xf32>
    %30 = arith.addf %3, %29 : vector<16x32xf32>
    %cst_18 = arith.constant dense<0.000000e+00> : vector<16xf32>
    %31 = vector.multi_reduction <add>, %30, %cst_18 [1] : vector<16x32xf32> to vector<16xf32>
    %32 = vector.shape_cast %31 : vector<16xf32> to vector<16x1xf32>
    %cst_19 = arith.constant 3.200000e+01 : f32
    %33 = vector.broadcast %cst_19 : f32 to vector<16x1xf32>
    %34 = arith.divf %32, %33 : vector<16x1xf32>
    %35 = vector.broadcast %34 : vector<16x1xf32> to vector<16x32xf32>
    %36 = arith.subf %30, %35 : vector<16x32xf32>
    %37 = arith.mulf %36, %36 : vector<16x32xf32>
    %cst_20 = arith.constant dense<0.000000e+00> : vector<16xf32>
    %38 = vector.multi_reduction <add>, %37, %cst_20 [1] : vector<16x32xf32> to vector<16xf32>
    %39 = vector.shape_cast %38 : vector<16xf32> to vector<16x1xf32>
    %cst_21 = arith.constant 3.200000e+01 : f32
    %40 = vector.broadcast %cst_21 : f32 to vector<16x1xf32>
    %41 = arith.divf %39, %40 : vector<16x1xf32>
    %42 = vector.broadcast %34 : vector<16x1xf32> to vector<16x32xf32>
    %43 = arith.subf %30, %42 : vector<16x32xf32>
    %cst_22 = arith.constant 9.99999974E-6 : f32
    %44 = vector.broadcast %cst_22 : f32 to vector<16x1xf32>
    %45 = arith.addf %41, %44 : vector<16x1xf32>
    %46 = math.rsqrt %45 : vector<16x1xf32>
    %47 = vector.broadcast %46 : vector<16x1xf32> to vector<16x32xf32>
    %48 = arith.mulf %43, %47 : vector<16x32xf32>
    %49 = vector.broadcast %4 : vector<1x32xf32> to vector<16x32xf32>
    %50 = arith.mulf %48, %49 : vector<16x32xf32>
    %51 = vector.broadcast %5 : vector<1x32xf32> to vector<16x32xf32>
    %52 = arith.addf %50, %51 : vector<16x32xf32>
    %c0_23 = arith.constant 0 : index
    %c0_24 = arith.constant 0 : index
    %c0_25 = arith.constant 0 : index
    %53 = vector.load %arg7[%c0_23, %c0_24, %c0_25] : memref<1x24x32xf32, #tpu.memory_space<vmem>>, vector<1x1x32xf32>
    %54 = vector.shape_cast %53 : vector<1x1x32xf32> to vector<1x32xf32>
    %55 = vector.shape_cast %28 : vector<1x32xf32> to vector<1x1x32xf32>
    tpu.vector_store %arg7[%c0_23, %c0_24, %c0_25], %55 {strides = array<i32>} : memref<1x24x32xf32, #tpu.memory_space<vmem>>, vector<1x1x32xf32>,
    %c0_26 = arith.constant 0 : index
    %c1_27 = arith.constant 1 : index
    %c0_28 = arith.constant 0 : index
    %56 = vector.load %arg7[%c0_26, %c1_27, %c0_28] : memref<1x24x32xf32, #tpu.memory_space<vmem>>, vector<1x16x32xf32>
    %57 = vector.shape_cast %56 : vector<1x16x32xf32> to vector<16x32xf32>
    %58 = vector.shape_cast %52 : vector<16x32xf32> to vector<1x16x32xf32>
    tpu.vector_store %arg7[%c0_26, %c1_27, %c0_28], %58 {strides = array<i32>} : memref<1x24x32xf32, #tpu.memory_space<vmem>>, vector<1x16x32xf32>,
    %cst_29 = arith.constant 0.000000e+00 : f32
    %59 = vector.broadcast %cst_29 : f32 to vector<7x32xf32>
    %c0_30 = arith.constant 0 : index
    %c17 = arith.constant 17 : index
    %c0_31 = arith.constant 0 : index
    %60 = vector.load %arg7[%c0_30, %c17, %c0_31] : memref<1x24x32xf32, #tpu.memory_space<vmem>>, vector<1x7x32xf32>
    %61 = vector.shape_cast %60 : vector<1x7x32xf32> to vector<7x32xf32>
    %62 = vector.shape_cast %59 : vector<7x32xf32> to vector<1x7x32xf32>
    tpu.vector_store %arg7[%c0_30, %c17, %c0_31], %62 {strides = array<i32>} : memref<1x24x32xf32, #tpu.memory_space<vmem>>, vector<1x7x32xf32>,
    return
  }
  func.func @transform_0(%arg0: i32) -> (i32, i32, i32) {
    %c0_i32 = arith.constant 0 : i32
    %c0_i32_0 = arith.constant 0 : i32
    %c0_i32_1 = arith.constant 0 : i32
    return %arg0, %c0_i32, %c0_i32_0 : i32, i32, i32
  }
  func.func @transform_1(%arg0: i32) -> (i32, i32) {
    %c0_i32 = arith.constant 0 : i32
    %c0_i32_0 = arith.constant 0 : i32
    %c0_i32_1 = arith.constant 0 : i32
    return %c0_i32, %c0_i32_0 : i32, i32
  }
  func.func @transform_2(%arg0: i32) -> (i32, i32) {
    %c0_i32 = arith.constant 0 : i32
    %c0_i32_0 = arith.constant 0 : i32
    %c0_i32_1 = arith.constant 0 : i32
    return %c0_i32, %c0_i32_0 : i32, i32
  }
  func.func @transform_3(%arg0: i32) -> (i32, i32) {
    %c0_i32 = arith.constant 0 : i32
    %c0_i32_0 = arith.constant 0 : i32
    %c0_i32_1 = arith.constant 0 : i32
    return %c0_i32, %c0_i32_0 : i32, i32
  }
  func.func @transform_4(%arg0: i32) -> (i32, i32) {
    %c0_i32 = arith.constant 0 : i32
    %c0_i32_0 = arith.constant 0 : i32
    %c0_i32_1 = arith.constant 0 : i32
    return %c0_i32, %c0_i32_0 : i32, i32
  }
  func.func @transform_5(%arg0: i32) -> (i32, i32) {
    %c0_i32 = arith.constant 0 : i32
    %c0_i32_0 = arith.constant 0 : i32
    %c0_i32_1 = arith.constant 0 : i32
    return %c0_i32, %c0_i32_0 : i32, i32
  }
  func.func @transform_6(%arg0: i32) -> (i32, i32, i32) {
    %c0_i32 = arith.constant 0 : i32
    %c0_i32_0 = arith.constant 0 : i32
    %c0_i32_1 = arith.constant 0 : i32
    return %arg0, %c0_i32, %c0_i32_0 : i32, i32, i32
  }
}

</mosaic_0001>

<llo_original>
// kernel: tpu_custom_call.1
$region0: #{tpu_custom_call.1}
  #allocation0 [shape = 'u32[]', space=smem, size = 0x4, offset = 0x4, fixed_abs, tag = 'smem constant byte address 0x4 - core index']
  #allocation1 [shape = 'u32[144,128]{1,0:T(1,128)}', space=vmem, size = 0x12000, scoped, tag = 'internal scratch']
  %s0 = inlined_call_operand.vmem [shape: bf16[2,16,48], index: 0, kind: input, shape index: {}]
  %s1 = inlined_call_operand.vmem [shape: bf16[48,32], index: 1, kind: input, shape index: {}]
  %s2 = inlined_call_operand.vmem [shape: f32[1,32], index: 2, kind: input, shape index: {}]
  %s3 = inlined_call_operand.vmem [shape: f32[17,32], index: 3, kind: input, shape index: {}]
  %s4 = inlined_call_operand.vmem [shape: f32[1,32], index: 4, kind: input, shape index: {}]
  %s5 = inlined_call_operand.vmem [shape: f32[1,32], index: 5, kind: input, shape index: {}]
  %s6 = inlined_call_operand.hbm [shape: f32[2,24,32], index: 6, kind: output, shape index: {}]
  %s7 = sld [smem:[#allocation0]]
  $region57: #{tpu_custom_call.1} parent=0
    _
  %s9 = ssub.s32 1, %s7
  %s10 = scalar_select 0, %s9, %s7
  $region1: #{tpu_custom_call.1} parent=0
    #allocation2 [shape = 'u8[24576]{0}', space=vmem, size = 0x6000, scoped, tag = 'output window, operand 0']
    #allocation3 [shape = 's32[2]{0}', space=sflag, size = 0x8, scoped, tag = 'scoped memory for tpu_custom_call.1']
    %11 = vsyncpa [#allocation3], 0
    %s12 = scalar_lea.sflag [#allocation3], 1
    %13 = vsyncpa %s12, 0
    loop: start=0, step=1, limit=4
    $region2: #{tpu_custom_call.1} parent=1 // loop_pre_header
      _
    $region3: #{tpu_custom_call.1} parent=1 // loop_header
      %s15 = sphi 0, %s19
      %p16 = scmp.ge.s32.totalorder %s15, 4
      %s25 = sphi 0, %s27
      %s28 = sphi 0, %s25
      %s29 = sphi 0, %s28
      %s45 = sphi 0, %s29
      %s49 = sphi 0, %s49
      %s51 = sphi 0, %s49
      %s52 = sphi 0, %s51
      %s66 = sphi 0, %s52
      %s70 = sphi 0, %s70
      %s72 = sphi 0, %s70
      %s73 = sphi 0, %s72
      %s87 = sphi 0, %s73
      %s91 = sphi 0, %s91
      %s93 = sphi 0, %s91
      %s94 = sphi 0, %s93
      %s108 = sphi 0, %s94
      %s112 = sphi 0, %s112
      %s114 = sphi 0, %s112
      %s115 = sphi 0, %s114
      %s129 = sphi 0, %s115
      %s133 = sphi 0, %s133
      %s135 = sphi 0, %s133
      %s136 = sphi 0, %s135
      %s150 = sphi 0, %s136
      %s156 = sphi 0, %s158
      %s159 = sphi 0, %s156
      %s160 = sphi 0, %s159
      %s176 = sphi 0, %s160
    $region4: #{tpu_custom_call.1} parent=1 // loop_header_branch
      %18 = sbr.rel (%p16) target = $region8
    $region5: #{tpu_custom_call.1} parent=1 // loop_body
      %s20 = ssub.s32 %s15, 1
      %s21 = ssub.s32 %s15, 2
      %s22 = sadd.s32 %s15, 1
      %s23 = ssub.s32 %s15, %s22
      %p24 = scmp.eq.s32.totalorder %s23, 0
      %s26 = sadd.s32 %s25, 1
      %s27 = scalar_select %p24, %s25, %s26
      %p30 = pneg %p24
      %p31 = scmp.eq.s32.totalorder %s15, 1
      %p32 = por %p30, %p31
      %p33 = scmp.ne.s32.totalorder %s25, %s28
      %p34 = scmp.eq.s32.totalorder %s15, 0
      %p35 = por %p33, %p34
      %p36 = scmp.ne.s32.totalorder %s25, %s28
      %p37 = scmp.eq.s32.totalorder %s20, 1
      %p38 = por %p36, %p37
      %p39 = scmp.ne.s32.totalorder %s28, %s29
      %p40 = scmp.eq.s32.totalorder %s20, 0
      %p41 = por %p39, %p40
      %p42 = scmp.ne.s32.totalorder %s28, %s29
      %p43 = scmp.eq.s32.totalorder %s21, 1
      %p44 = por %p42, %p43
      %p46 = scmp.ne.s32.totalorder %s29, %s45
      %p47 = scmp.eq.s32.totalorder %s21, 0
      %p48 = por %p46, %p47
      %s50 = sadd.s32 %s49, 1
      %p53 = scmp.eq.s32.totalorder %s15, 1
      %p54 = scmp.ne.s32.totalorder %s49, %s51
      %p55 = scmp.eq.s32.totalorder %s15, 0
      %p56 = por %p54, %p55
      %p57 = scmp.ne.s32.totalorder %s49, %s51
      %p58 = scmp.eq.s32.totalorder %s20, 1
      %p59 = por %p57, %p58
      %p60 = scmp.ne.s32.totalorder %s51, %s52
      %p61 = scmp.eq.s32.totalorder %s20, 0
      %p62 = por %p60, %p61
      %p63 = scmp.ne.s32.totalorder %s51, %s52
      %p64 = scmp.eq.s32.totalorder %s21, 1
      %p65 = por %p63, %p64
      %p67 = scmp.ne.s32.totalorder %s52, %s66
      %p68 = scmp.eq.s32.totalorder %s21, 0
      %p69 = por %p67, %p68
      %s71 = sadd.s32 %s70, 1
      %p74 = scmp.eq.s32.totalorder %s15, 1
      %p75 = scmp.ne.s32.totalorder %s70, %s72
      %p76 = scmp.eq.s32.totalorder %s15, 0
      %p77 = por %p75, %p76
      %p78 = scmp.ne.s32.totalorder %s70, %s72
      %p79 = scmp.eq.s32.totalorder %s20, 1
      %p80 = por %p78, %p79
      %p81 = scmp.ne.s32.totalorder %s72, %s73
      %p82 = scmp.eq.s32.totalorder %s20, 0
      %p83 = por %p81, %p82
      %p84 = scmp.ne.s32.totalorder %s72, %s73
      %p85 = scmp.eq.s32.totalorder %s21, 1
      %p86 = por %p84, %p85
      %p88 = scmp.ne.s32.totalorder %s73, %s87
      %p89 = scmp.eq.s32.totalorder %s21, 0
      %p90 = por %p88, %p89
      %s92 = sadd.s32 %s91, 1
      %p95 = scmp.eq.s32.totalorder %s15, 1
      %p96 = scmp.ne.s32.totalorder %s91, %s93
      %p97 = scmp.eq.s32.totalorder %s15, 0
      %p98 = por %p96, %p97
      %p99 = scmp.ne.s32.totalorder %s91, %s93
      %p100 = scmp.eq.s32.totalorder %s20, 1
      %p101 = por %p99, %p100
      %p102 = scmp.ne.s32.totalorder %s93, %s94
      %p103 = scmp.eq.s32.totalorder %s20, 0
      %p104 = por %p102, %p103
      %p105 = scmp.ne.s32.totalorder %s93, %s94
      %p106 = scmp.eq.s32.totalorder %s21, 1
      %p107 = por %p105, %p106
      %p109 = scmp.ne.s32.totalorder %s94, %s108
      %p110 = scmp.eq.s32.totalorder %s21, 0
      %p111 = por %p109, %p110
      %s113 = sadd.s32 %s112, 1
      %p116 = scmp.eq.s32.totalorder %s15, 1
      %p117 = scmp.ne.s32.totalorder %s112, %s114
      %p118 = scmp.eq.s32.totalorder %s15, 0
      %p119 = por %p117, %p118
      %p120 = scmp.ne.s32.totalorder %s112, %s114
      %p121 = scmp.eq.s32.totalorder %s20, 1
      %p122 = por %p120, %p121
      %p123 = scmp.ne.s32.totalorder %s114, %s115
      %p124 = scmp.eq.s32.totalorder %s20, 0
      %p125 = por %p123, %p124
      %p126 = scmp.ne.s32.totalorder %s114, %s115
      %p127 = scmp.eq.s32.totalorder %s21, 1
      %p128 = por %p126, %p127
      %p130 = scmp.ne.s32.totalorder %s115, %s129
      %p131 = scmp.eq.s32.totalorder %s21, 0
      %p132 = por %p130, %p131
      %s134 = sadd.s32 %s133, 1
      %p137 = scmp.eq.s32.totalorder %s15, 1
      %p138 = scmp.ne.s32.totalorder %s133, %s135
      %p139 = scmp.eq.s32.totalorder %s15, 0
      %p140 = por %p138, %p139
      %p141 = scmp.ne.s32.totalorder %s133, %s135
      %p142 = scmp.eq.s32.totalorder %s20, 1
      %p143 = por %p141, %p142
      %p144 = scmp.ne.s32.totalorder %s135, %s136
      %p145 = scmp.eq.s32.totalorder %s20, 0
      %p146 = por %p144, %p145
      %p147 = scmp.ne.s32.totalorder %s135, %s136
      %p148 = scmp.eq.s32.totalorder %s21, 1
      %p149 = por %p147, %p148
      %p151 = scmp.ne.s32.totalorder %s136, %s150
      %p152 = scmp.eq.s32.totalorder %s21, 0
      %p153 = por %p151, %p152
      %s154 = ssub.s32 %s15, %s22
      %p155 = scmp.eq.s32.totalorder %s154, 0
      %s157 = sadd.s32 %s156, 1
      %s158 = scalar_select %p155, %s156, %s157
      %p161 = pneg %p155
      %p162 = scmp.eq.s32.totalorder %s15, 1
      %p163 = por %p161, %p162
      %p164 = scmp.ne.s32.totalorder %s156, %s159
      %p165 = scmp.eq.s32.totalorder %s15, 0
      %p166 = por %p164, %p165
      %p167 = scmp.ne.s32.totalorder %s156, %s159
      %p168 = scmp.eq.s32.totalorder %s20, 1
      %p169 = por %p167, %p168
      %p170 = scmp.ne.s32.totalorder %s159, %s160
      %p171 = scmp.eq.s32.totalorder %s20, 0
      %p172 = por %p170, %p171
      %p173 = scmp.ne.s32.totalorder %s159, %s160
      %p174 = scmp.eq.s32.totalorder %s21, 1
      %p175 = por %p173, %p174
      %p177 = scmp.ne.s32.totalorder %s160, %s176
      %p178 = scmp.eq.s32.totalorder %s21, 0
      %p179 = por %p177, %p178
      %p180 = scmp.le.s32.totalorder 1, %s15
      %p181 = scmp.lt.s32.totalorder %s15, 3
      %p182 = pnand %p180, %p181
      %p183 = pneg %p182
      // Predicated region
      $region9: #{tpu_custom_call.1} parent=5 // pred_check
        _
      $region10: #{tpu_custom_call.1} parent=5 // pred_check_branch
        %185 = sbr.rel (%p182) target = $region12
      $region11: #{tpu_custom_call.1} parent=5 // pred_region
        %s186 = ssub.s32 %s15, 1
        // Predicated region
        $region13: #{tpu_custom_call.1} parent=11 // pred_check
          %p187 = pneg %p62
        $region14: #{tpu_custom_call.1} parent=11 // pred_check_branch
          %189 = sbr.rel (%p187) target = $region16
        $region15: #{tpu_custom_call.1} parent=11 // pred_region
          _
        $region16: #{tpu_custom_call.1} parent=11 // pred_fallthru
          _
        // Predicated region
        $region17: #{tpu_custom_call.1} parent=11 // pred_check
          %p190 = pneg %p83
        $region18: #{tpu_custom_call.1} parent=11 // pred_check_branch
          %192 = sbr.rel (%p190) target = $region20
        $region19: #{tpu_custom_call.1} parent=11 // pred_region
          _
        $region20: #{tpu_custom_call.1} parent=11 // pred_fallthru
          _
        // Predicated region
        $region21: #{tpu_custom_call.1} parent=11 // pred_check
          %p193 = pneg %p104
        $region22: #{tpu_custom_call.1} parent=11 // pred_check_branch
          %195 = sbr.rel (%p193) target = $region24
        $region23: #{tpu_custom_call.1} parent=11 // pred_region
          _
        $region24: #{tpu_custom_call.1} parent=11 // pred_fallthru
          _
        // Predicated region
        $region25: #{tpu_custom_call.1} parent=11 // pred_check
          %p196 = pneg %p125
        $region26: #{tpu_custom_call.1} parent=11 // pred_check_branch
          %198 = sbr.rel (%p196) target = $region28
        $region27: #{tpu_custom_call.1} parent=11 // pred_region
          _
        $region28: #{tpu_custom_call.1} parent=11 // pred_fallthru
          _
        // Predicated region
        $region29: #{tpu_custom_call.1} parent=11 // pred_check
          %p199 = pneg %p146
        $region30: #{tpu_custom_call.1} parent=11 // pred_check_branch
          %201 = sbr.rel (%p199) target = $region32
        $region31: #{tpu_custom_call.1} parent=11 // pred_region
          _
        $region32: #{tpu_custom_call.1} parent=11 // pred_fallthru
          _
      $region12: #{tpu_custom_call.1} parent=5 // pred_fallthru
        _
      %p202 = scmp.lt.s32.totalorder %s15, 2
      // Predicated region
      $region33: #{tpu_custom_call.1} parent=5 // pred_check
        %p203 = pneg %p202
      $region34: #{tpu_custom_call.1} parent=5 // pred_check_branch
        %205 = sbr.rel (%p203) target = $region36
      $region35: #{tpu_custom_call.1} parent=5 // pred_region
        // Predicated region
        $region37: #{tpu_custom_call.1} parent=35 // pred_check
          %p206 = pneg %p35
        $region38: #{tpu_custom_call.1} parent=35 // pred_check_branch
          %208 = sbr.rel (%p206) target = $region40
        $region39: #{tpu_custom_call.1} parent=35 // pred_region
          %p209 = scmp.lt.s32.totalorder %s15, 1
          %s210 = scalar_select %p209, %s15, 1
          %s211 = smul.addr %s210, 2
          %s212 = smul.addr %s211, 4
          %s213 = scalar_lea.vmem %s0, %s212
        $region40: #{tpu_custom_call.1} parent=35 // pred_fallthru
          _
      $region36: #{tpu_custom_call.1} parent=5 // pred_fallthru
        _
      %p214 = scmp.le.s32.totalorder 1, %s15
      %p215 = scmp.lt.s32.totalorder %s15, 3
      %p216 = pnand %p214, %p215
      %p217 = pneg %p216
      // Predicated region
      $region41: #{tpu_custom_call.1} parent=5 // pred_check
        _
      $region42: #{tpu_custom_call.1} parent=5 // pred_check_branch
        %219 = sbr.rel (%p216) target = $region44
      $region43: #{tpu_custom_call.1} parent=5 // pred_region
        %s220 = ssub.s32 %s15, 1
        %p221 = scmp.lt.s32.totalorder %s20, 1
        %s222 = scalar_select %p221, %s20, 1
        %s223 = smul.addr %s222, 2
        %s224 = smul.addr %s223, 4
        %s225 = scalar_lea.vmem %s0, %s224
        %p226 = pneg %p41
        %p227 = pneg %p38
        %p228 = pneg %p62
        %p229 = pneg %p59
        %p230 = pneg %p83
        %p231 = pneg %p80
        %p232 = pneg %p104
        %p233 = pneg %p101
        %p234 = pneg %p125
        %p235 = pneg %p122
        %p236 = pneg %p146
        %p237 = pneg %p143
        %p238 = pneg %p172
        %p239 = pneg %p169
        %s240 = sand.u32 %s159, 1
        %s241 = scalar_lea.sflag [#allocation3], %s240
        %s242 = sand.u32 %s159, 1
        %s243 = smul.addr %s242, 24
        %s244 = scalar_lea.vmem [#allocation2], %s243
        %p245 = scmp.lt.s32.totalorder %s20, 1
        %s246 = scalar_select %p245, %s20, 1
        %s247 = smul.addr %s246, 2
        %s248 = smul.addr %s247, 4
        %s249 = scalar_lea.vmem %s0, %s248
        %v251 = vld [vmem:[%s249] sm:$0xf]
        %v252 = vld [vmem:[%s249 + $0x4] sm:$0xf]
        %v253 = vld [vmem:[%s1] sm:$0xf]
        %v254 = vld [vmem:[%s1 + $0x4] sm:$0xf]
        %v255 = vld [vmem:[%s1 + $0x8] sm:$0xf]
        %v256 = vld [vmem:[%s1 + $0xc] sm:$0xf]
        %v257 = vld [vmem:[%s1 + $0x10] sm:$0xf]
        %v258 = vld [vmem:[%s1 + $0x14] sm:$0xf]
        %v259 = vld [vmem:[%s4] sm:$0x1]
        %v260 = vld [vmem:[%s5] sm:$0x1]
        %v261 = vld [vmem:[%s2] sm:$0x1]
        %v262 = vld [vmem:[%s3] sm:$0x1]
        %v263 = vadd.f32 %v261, %v262
        %vm264 = vcmask 253952
        %v265 = vsel %vm264, %v263, 0.0
        %266 = vadd.xlane.f32.xlu0 %v265
        %v267 = vpop.xlane.xlu0 %266
        %v268 = vrcp.pop 32.0
        %v269 = vmul.f32 %v267, %v268
        %v270 = vsub.f32 %v263, %v269
        %v271 = vmul.f32 %v270, %v270
        %v272 = vsel %vm264, %v271, 0.0
        %273 = vadd.xlane.f32.xlu0 %v272
        %v274 = vpop.xlane.xlu0 %273
        %v275 = vmul.f32 %v274, %v268
        %v276 = vadd.f32 %v275, 1e-05
        %v277 = vrsqrt.pop %v276
        %v278 = vmul.f32 %v270, %v277
        %v279 = vmul.f32 %v278, %v259
        %v280 = vadd.f32 %v279, %v260
        %v281 = vld [vmem:[%s3 + $0x1] sm:$0xff]
        %v282 = vld [vmem:[%s3 + $0x9] sm:$0xff]
        %v285 = vunpack.c.l.b16 %v251
        %v286 = vunpack.c.l.b16 %v252
        %v287 = vpack.c.b16 %v286, %v285
        %v294 = vunpack.c.l.b16 %v253
        %v295 = vunpack.c.l.b16 %v254
        %v296 = vunpack.c.l.b16 %v255
        %v297 = vunpack.c.l.b16 %v256
        %v298 = vunpack.c.l.b16 %v257
        %v299 = vunpack.c.l.b16 %v258
        %v300 = vpack.c.b16 %v295, %v294
        %v301 = vpack.c.b16 %v297, %v296
        %v302 = vpack.c.b16 %v299, %v298
        %vm306 = vcmask 392192
        %v308 = vsel %vm306, %v287, 0
        %310 = vmatprep.subr.bf16.mxu0 0
        %311 = vmatpush1.bf16.msra.mxu0 %v300
        %312 = vmatprep.subr.bf16.mxu0 0
        %313 = vmatpush1.bf16.msra.mxu0 %v301
        %314 = vmatprep.subr.bf16.mxu0 0
        %315 = vmatpush1.bf16.msra.mxu0 %v302
        %316 = vmatprep.subr.bf16.mxu0 0
        %317 = vmatpush1.bf16.msra.mxu0 0
        %318 = vmatprep.subr.bf16.mxu0 0
        %319 = vmatpush1.bf16.msra.mxu0 0
        %320 = vmatprep.subr.bf16.mxu0 0
        %321 = vmatpush1.bf16.msra.mxu0 0
        %322 = vmatprep.subr.bf16.mxu0 0
        %323 = vmatpush1.bf16.msra.mxu0 0
        %324 = vmatprep.subr.bf16.mxu0 0
        %325 = vmatpush1.bf16.msra.mxu0 0
        %326 = vmatprep.subr.bf16.mxu0 0
        %327 = vmatpush1.bf16.msra.mxu0 0
        %328 = vmatprep.subr.bf16.mxu0 0
        %329 = vmatpush1.bf16.msra.mxu0 0
        %330 = vmatprep.subr.bf16.mxu0 0
        %331 = vmatpush1.bf16.msra.mxu0 0
        %332 = vmatprep.subr.bf16.mxu0 0
        %333 = vmatpush1.bf16.msra.mxu0 0
        %334 = vmatprep.subr.bf16.mxu0 0
        %335 = vmatpush1.bf16.msra.mxu0 0
        %336 = vmatprep.subr.bf16.mxu0 0
        %337 = vmatpush1.bf16.msra.mxu0 0
        %338 = vmatprep.subr.bf16.mxu0 0
        %339 = vmatpush1.bf16.msra.mxu0 0
        %340 = vmatprep.subr.bf16.mxu0 0
        %341 = vmatpush1.bf16.msra.mxu0 0
        %342 = vmatprep.mubr.bf16.mxu0 0
        %343 = vmatmul.mubr.bf16.gmra.mrb[0].mxu0 %v308
        %v344 = vpop.f32.mrb[0].mxu0
        %v345 = vadd.f32 %v281, %v344
        %v346 = vpop.f32.mrb[0].mxu0
        %v347 = vpop.f32.mrb[0].mxu0
        %v348 = vadd.f32 %v282, %v347
        %v349 = vpop.f32.mrb[0].mxu0
        %350 = vdwg.mxu0
        %vm351 = vcmask 261120
        %v352 = vsel %vm351, %v345, 0.0
        %353 = vadd.xlane.f32.xlu0 %v352
        %v354 = vpop.xlane.xlu0 %353
        %v355 = vsel %vm351, %v348, 0.0
        %356 = vadd.xlane.f32.xlu0 %v355
        %v357 = vpop.xlane.xlu0 %356
        %v358 = vmul.f32 %v354, %v268
        %v359 = vmul.f32 %v357, %v268
        %v360 = vsub.f32 %v345, %v358
        %v361 = vsub.f32 %v348, %v359
        %v362 = vmul.f32 %v360, %v360
        %v363 = vmul.f32 %v361, %v361
        %v364 = vsel %vm351, %v362, 0.0
        %365 = vadd.xlane.f32.xlu0 %v364
        %v366 = vpop.xlane.xlu0 %365
        %v367 = vsel %vm351, %v363, 0.0
        %368 = vadd.xlane.f32.xlu0 %v367
        %v369 = vpop.xlane.xlu0 %368
        %v370 = vmul.f32 %v366, %v268
        %v371 = vmul.f32 %v369, %v268
        %v372 = vadd.f32 %v370, 1e-05
        %v373 = vadd.f32 %v371, 1e-05
        %v374 = vrsqrt.pop %v372
        %v375 = vrsqrt.pop %v373
        %v376 = vmul.f32 %v360, %v374
        %v377 = vmul.f32 %v361, %v375
        %v379 = vlaneseq
        %v380 = vshrl.u32 %v379, 7
        %v381 = vsub.s32 0, %v380
        %v382 = vrot.slane %v259, %v381
        %v384 = vmul.f32 %v376, %v382
        %v385 = vmul.f32 %v377, %v382
        %v387 = vlaneseq
        %v388 = vshrl.u32 %v387, 7
        %v389 = vsub.s32 0, %v388
        %v390 = vrot.slane %v260, %v389
        %v392 = vadd.f32 %v384, %v390
        %v393 = vadd.f32 %v385, %v390
        %394 = vst.msk [vmem:[%s244] sm:$0x1] %vm264, %v280
        %395 = vst.msk [vmem:[%s244 + $0x1] sm:$0xff] %vm351, %v392
        %396 = vst.msk [vmem:[%s244 + $0x9] sm:$0xff] %vm351, %v393
        %vm397 = vcmask 260096
        %398 = vst.msk [vmem:[%s244 + $0x11] sm:$0x7f] %vm397, 0.0
        %s399 = sand.u32 %s159, 1
        %s400 = scalar_lea.sflag [#allocation3], %s399
        %s401 = sand.u32 %s159, 1
        %s402 = smul.addr %s401, 24
        %s403 = scalar_lea.vmem [#allocation2], %s402
        // Predicated region
        $region45: #{tpu_custom_call.1} parent=43 // pred_check
          %p404 = pneg %p169
        $region46: #{tpu_custom_call.1} parent=43 // pred_check_branch
          %406 = sbr.rel (%p404) target = $region48
        $region47: #{tpu_custom_call.1} parent=43 // pred_region
          %s408 = ssub.s32 384, 384
          %409 = vsyncadd %s400, %s408
          %s410 = smul.addr %s20, 3
          %s411 = smul.addr %s410, 128
          %s412 = scalar_lea.hbm %s6, %s411
          %s413 = sshll.u32 %s403, 4
          %s414 = int_to_ptr.vmem [resolvable:$true] %s413
          %419 = dma.vmem_to_hbm [thread:$0]  %s414, 384, %s412, %s400, 128, 128, 8
        $region48: #{tpu_custom_call.1} parent=43 // pred_fallthru
          _
      $region44: #{tpu_custom_call.1} parent=5 // pred_fallthru
        _
      %p420 = scmp.le.s32.totalorder 2, %s15
      // Predicated region
      $region49: #{tpu_custom_call.1} parent=5 // pred_check
        %p421 = pneg %p420
      $region50: #{tpu_custom_call.1} parent=5 // pred_check_branch
        %423 = sbr.rel (%p421) target = $region52
      $region51: #{tpu_custom_call.1} parent=5 // pred_region
        %s424 = ssub.s32 %s15, 2
        // Predicated region
        $region53: #{tpu_custom_call.1} parent=51 // pred_check
          %p425 = pneg %p175
        $region54: #{tpu_custom_call.1} parent=51 // pred_check_branch
          %427 = sbr.rel (%p425) target = $region56
        $region55: #{tpu_custom_call.1} parent=51 // pred_region
          %s428 = sand.u32 %s160, 1
          %s429 = scalar_lea.sflag [#allocation3], %s428
          %s430 = sand.u32 %s160, 1
          %s431 = smul.addr %s430, 24
          %s432 = scalar_lea.vmem [#allocation2], %s431
          %433 = dma.done %s429, 384
        $region56: #{tpu_custom_call.1} parent=51 // pred_fallthru
          _
      $region52: #{tpu_custom_call.1} parent=5 // pred_fallthru
        _
    $region6: #{tpu_custom_call.1} parent=1 // loop_footer
      %s19 = sadd.s32 1, %s15
    $region7: #{tpu_custom_call.1} parent=1 // loop_footer_branch
      %14 = sbr.rel target = $region3
    $region8: #{tpu_custom_call.1} parent=1 // loop_exit
      _
    %434 = vsyncpa [#allocation3], 1
    %s435 = scalar_lea.sflag [#allocation3], 1
    %436 = vsyncpa %s435, 1

</llo_original>
